<compile_context>
chip_gen: v7x
topology: tpu7x:2x2x1
jax: 0.10.0
libtpu: 0.0.40
codegen_flags: <defaults>
</compile_context>

<pallas_src>
import functools

import jax
import jax.numpy as jnp
from jax.experimental import pallas as pl
from jax.experimental.pallas import tpu as pltpu


def _round_up(x, m):
    return (x + m - 1) // m * m


# Batches whose sublane-rounded size is <= this go through the single-shot
# (no-grid) path; larger batches use the batch-tiled grid.
_SINGLE_SHOT_MAX_B = 128


@functools.lru_cache(maxsize=1)
def _chip_has_bf16_vpu():
    """v6e/v7x have bf16 VPU/EUP (cheap bf16 tanh); v5e and older do not."""
    try:
        kind = jax.devices()[0].device_kind.lower()
    except Exception:
        return False
    return any(tag in kind for tag in ("v6", "v7", "tpu7"))


def _pick_batch_tile(B):
    """Pick the batch tile TM from {512, 256, 128}.

    Priority: (1) minimize padded rows (waste < one tile), (2) prefer >= 2
    tiles so the "parallel" grid axis shards across v7x's 2 TensorCores,
    (3) prefer the larger tile to amortize the ~0.35us per-grid-step cost.
    """
    best = None
    for tm in (512, 256, 128):
        bp = _round_up(B, tm)
        tiles = bp // tm
        key = (bp - B, 0 if tiles >= 2 else 1, -tm)
        if best is None or key < best[0]:
            best = (key, tm, bp)
    return best[1], best[2]


def _vmem_limit(resident_bytes):
    # Explicit scoped-VMEM request sized from the actual resident buffers with
    # 2x headroom for compiler temporaries; clamped so it is always legal on
    # v5e/v6e (128 MiB physical) and v7x (64 MiB physical).
    # TODO(synk): K-tile the first matmul (tk~512 "arbitrary" reduction axis +
    # f32 acc scratch) once Hp is large enough that the resident [Hp,Hp] bf16
    # weight no longer fits this budget (wav2vec2-large, Hp >= 4096).
    return int(min(max(2 * resident_bytes + (4 << 20), 32 << 20), 48 << 20))


def _regression_head_kernel(x_ref, w1_ref, b1_ref, w2_ref, b2_ref, o_ref, *,
                            tanh_in_bf16):
    # dense + tanh + out_proj fused in one VMEM-resident pass.
    x = x_ref[...].astype(jnp.bfloat16)                                # cast in VMEM (no padded HBM copy)
    h = jnp.dot(x, w1_ref[...], preferred_element_type=jnp.float32)    # MXU -> f32 acc
    h = h + b1_ref[...]                                                # f32 bias add
    if tanh_in_bf16:
        # v6e/v7x: bf16 EUP/VPU -> halve tanh work + intermediate footprint.
        h = jnp.tanh(h.astype(jnp.bfloat16))
    else:
        # v5e: no bf16 elementwise path; keep tanh in f32, cast for the MXU.
        h = jnp.tanh(h).astype(jnp.bfloat16)
    y = jnp.dot(h, w2_ref[...], preferred_element_type=jnp.float32)    # MXU -> f32 acc
    o_ref[...] = (y + b2_ref[...]).astype(o_ref.dtype)                 # lane-dense store


def regression_head_params(w1, b1, w2, b2):
    """Precompute MXU-ready weights ONCE (hoisted out of the per-call path).

    PyTorch Linear stores [out, in]; transpose to [in, out], zero-pad the
    contraction / lane dims to multiples of 128, cast weights to bf16.
    Biases stay f32 (row-broadcast inside the kernel).
    """
    f32, bf16 = jnp.float32, jnp.bfloat16
    w1 = jnp.asarray(w1, f32)
    b1 = jnp.asarray(b1, f32)
    w2 = jnp.asarray(w2, f32)
    b2 = jnp.asarray(b2, f32)

    H = w1.shape[1]
    L = w2.shape[0]
    Hp = _round_up(H, 128)   # lanes for first-matmul N / contraction dims
    Lp = _round_up(L, 128)   # lane-dense output store

    w1_t = jnp.zeros((Hp, Hp), bf16).at[:H, :H].set(w1.T.astype(bf16))
    b1_r = jnp.zeros((1, Hp), f32).at[:, :H].set(b1.reshape(1, H))
    w2_t = jnp.zeros((Hp, Lp), bf16).at[:H, :L].set(w2.T.astype(bf16))
    b2_r = jnp.zeros((1, Lp), f32).at[:, :L].set(b2.reshape(1, L))

    return {"w1_t": w1_t, "b1_r": b1_r, "w2_t": w2_t, "b2_r": b2_r,
            "H": H, "L": L, "Hp": Hp, "Lp": Lp}


def regression_head_apply(features, params):
    """features: [B, H] float32; params: output of regression_head_params."""
    B, H = features.shape
    assert H == params["H"], (H, params["H"])
    Hp, Lp, L = params["Hp"], params["Lp"], params["L"]
    f32 = jnp.float32

    x = jnp.asarray(features, f32)
    kernel = functools.partial(_regression_head_kernel,
                               tanh_in_bf16=_chip_has_bf16_vpu())
    args_w = (params["w1_t"], params["b1_r"], params["w2_t"], params["b2_r"])

    def pad_x(Bp):
        # Only materialize a padded copy when the shapes actually require it;
        # padded rows/lanes are zero (tanh(0)=0, zero w2 rows contribute 0).
        if Bp == B and Hp == H:
            return x
        return jnp.zeros((Bp, Hp), f32).at[:B, :H].set(x)

    Bs = _round_up(B, 8)   # f32 sublane alignment
    if Bs <= _SINGLE_SHOT_MAX_B:
        # Small batch: single invocation, everything resident in VMEM.
        Bp = Bs
        x_in = pad_x(Bp)
        resident_bytes = (Bp * Hp * 4          # x (f32)
                          + Hp * Hp * 2        # w1 (bf16)
                          + Hp * Lp * 2        # w2 (bf16)
                          + (Hp + Lp) * 4      # biases
                          + Bp * Lp * 4        # out
                          + Bp * Hp * 4)       # f32 intermediate ceiling
        out_p = pl.pallas_call(
            kernel,
            out_shape=jax.ShapeDtypeStruct((Bp, Lp), f32),
            in_specs=[pl.BlockSpec(memory_space=pltpu.MemorySpace.VMEM)] * 5,
            out_specs=pl.BlockSpec(memory_space=pltpu.MemorySpace.VMEM),
            compiler_params=pltpu.CompilerParams(
                vmem_limit_bytes=_vmem_limit(resident_bytes)),
        )(x_in, *args_w)
    else:
        # Larger batch: tile B ("parallel" axis -> megacore sharding on v7x),
        # keep block-invariant weights/biases single-buffered in VMEM.
        tm, Bp = _pick_batch_tile(B)
        x_in = pad_x(Bp)
        resident_bytes = (2 * tm * Hp * 4      # double-buffered x tiles
                          + 2 * tm * Lp * 4    # double-buffered out tiles
                          + Hp * Hp * 2        # w1, single-buffered
                          + Hp * Lp * 2        # w2, single-buffered
                          + (Hp + Lp) * 4      # biases
                          + tm * Hp * 4)       # f32 intermediate ceiling
        resident = pl.Buffered(1)              # constant index_map -> no double buffering
        out_p = pl.pallas_call(
            kernel,
            out_shape=jax.ShapeDtypeStruct((Bp, Lp), f32),
            grid=(Bp // tm,),
            in_specs=[
                pl.BlockSpec((tm, Hp), lambda i: (i, 0)),
                pl.BlockSpec((Hp, Hp), lambda i: (0, 0), pipeline_mode=resident),
                pl.BlockSpec((1, Hp), lambda i: (0, 0), pipeline_mode=resident),
                pl.BlockSpec((Hp, Lp), lambda i: (0, 0), pipeline_mode=resident),
                pl.BlockSpec((1, Lp), lambda i: (0, 0), pipeline_mode=resident),
            ],
            out_specs=pl.BlockSpec((tm, Lp), lambda i: (i, 0)),
            compiler_params=pltpu.CompilerParams(
                dimension_semantics=("parallel",),
                vmem_limit_bytes=_vmem_limit(resident_bytes)),
        )(x_in, *args_w)

    # Slice padded rows/lanes back off outside the kernel.
    return out_p[:B, :L].astype(features.dtype)


def regression_head(features, w1, b1, w2, b2):
    """One-shot convenience wrapper.

    In production, call regression_head_params() once at module init and reuse
    the prepared params across forwards (weight prep is the dominant per-call
    cost at realistic hidden sizes).
    """
    return regression_head_apply(features, regression_head_params(w1, b1, w2, b2))


def regression_head_ref(features, w1, b1, w2, b2):
    """Pure-JAX reference (matches PyTorch eval-mode forward)."""
    h = jnp.tanh(features @ w1.T + b1)
    return h @ w2.T + b2


if __name__ == "__main__":
    # config.hidden_size = 32, config.num_labels = 4, batch = 2
    B, H, L = 2, 32, 4
    key = jax.random.PRNGKey(0)
    k_x, k_w1, k_b1, k_w2, k_b2 = jax.random.split(key, 5)

    features = jax.random.normal(k_x, (B, H), dtype=jnp.float32)
    # Deterministic synthetic parameters (PyTorch Linear layout: [out, in]).
    w1 = jax.random.normal(k_w1, (H, H), dtype=jnp.float32) * 0.05
    b1 = jax.random.normal(k_b1, (H,), dtype=jnp.float32) * 0.05
    w2 = jax.random.normal(k_w2, (L, H), dtype=jnp.float32) * 0.05
    b2 = jax.random.normal(k_b2, (L,), dtype=jnp.float32) * 0.05

    # Hoisted weight prep: done once, reused by every forward below.
    params = regression_head_params(w1, b1, w2, b2)

    # Small-batch (no-grid) path.
    out = jax.block_until_ready(regression_head_apply(features, params))
    ref = regression_head_ref(features, w1, b1, w2, b2)
    assert out.shape == (B, L), out.shape
    # bf16 MXU inputs with f32 accumulation -> loosened tolerance vs f32 ref.
    assert jnp.allclose(out, ref, atol=2e-2, rtol=2e-2), (
        f"max abs err = {jnp.max(jnp.abs(out - ref))}")

    # Larger ragged batch -> gridded path (TM=128: 3 tiles, only 84 padded rows).
    B2 = 300
    feats2 = jax.random.normal(jax.random.PRNGKey(1), (B2, H), dtype=jnp.float32)
    out2 = jax.block_until_ready(regression_head_apply(feats2, params))
    ref2 = regression_head_ref(feats2, w1, b1, w2, b2)
    assert out2.shape == (B2, L), out2.shape
    assert jnp.allclose(out2, ref2, atol=2e-2, rtol=2e-2), (
        f"max abs err = {jnp.max(jnp.abs(out2 - ref2))}")

    print("KERNEL_OK")
</pallas_src>

<mosaic_0001>
module attributes {stable_mosaic.version = 11 : i64} {
  func.func @_regression_head_kernel(%arg0: memref<8x128xf32, #tpu.memory_space<vmem>>, %arg1: memref<128x128xbf16, #tpu.memory_space<vmem>>, %arg2: memref<1x128xf32, #tpu.memory_space<vmem>>, %arg3: memref<128x128xbf16, #tpu.memory_space<vmem>>, %arg4: memref<1x128xf32, #tpu.memory_space<vmem>>, %arg5: memref<8x128xf32, #tpu.memory_space<vmem>>) attributes {dimension_semantics = [], scalar_prefetch = 0 : i64, scratch_operands = 0 : i64, tpu.core_type = #tpu.core_type<tc>} {
    %c0 = arith.constant 0 : index
    %c0_0 = arith.constant 0 : index
    %0 = vector.load %arg0[%c0, %c0_0] : memref<8x128xf32, #tpu.memory_space<vmem>>, vector<8x128xf32>
    %1 = arith.truncf %0 : vector<8x128xf32> to vector<8x128xbf16>
    %c0_1 = arith.constant 0 : index
    %c0_2 = arith.constant 0 : index
    %2 = vector.load %arg1[%c0_1, %c0_2] : memref<128x128xbf16, #tpu.memory_space<vmem>>, vector<128x128xbf16>
    %cst = arith.constant dense<0.000000e+00> : vector<8x128xf32>
    %3 = tpu.matmul %1, %2, %cst {dimension_numbers = #tpu.dot_dimension_numbers<[1], [0], [0], [1], [0, 0, 1, 1], [], []>} : vector<8x128xbf16>, vector<128x128xbf16>, vector<8x128xf32> -> vector<8x128xf32>
    %c0_3 = arith.constant 0 : index
    %c0_4 = arith.constant 0 : index
    %4 = vector.load %arg2[%c0_3, %c0_4] : memref<1x128xf32, #tpu.memory_space<vmem>>, vector<1x128xf32>
    %5 = vector.broadcast %4 : vector<1x128xf32> to vector<8x128xf32>
    %6 = arith.addf %3, %5 : vector<8x128xf32>
    %7 = math.tanh %6 : vector<8x128xf32>
    %8 = arith.truncf %7 : vector<8x128xf32> to vector<8x128xbf16>
    %c0_5 = arith.constant 0 : index
    %c0_6 = arith.constant 0 : index
    %9 = vector.load %arg3[%c0_5, %c0_6] : memref<128x128xbf16, #tpu.memory_space<vmem>>, vector<128x128xbf16>
    %cst_7 = arith.constant dense<0.000000e+00> : vector<8x128xf32>
    %10 = tpu.matmul %8, %9, %cst_7 {dimension_numbers = #tpu.dot_dimension_numbers<[1], [0], [0], [1], [0, 0, 1, 1], [], []>} : vector<8x128xbf16>, vector<128x128xbf16>, vector<8x128xf32> -> vector<8x128xf32>
    %c0_8 = arith.constant 0 : index
    %c0_9 = arith.constant 0 : index
    %11 = vector.load %arg4[%c0_8, %c0_9] : memref<1x128xf32, #tpu.memory_space<vmem>>, vector<1x128xf32>
    %12 = vector.broadcast %11 : vector<1x128xf32> to vector<8x128xf32>
    %13 = arith.addf %10, %12 : vector<8x128xf32>
    %c0_10 = arith.constant 0 : index
    %c0_11 = arith.constant 0 : index
    %14 = vector.load %arg5[%c0_10, %c0_11] : memref<8x128xf32, #tpu.memory_space<vmem>>, vector<8x128xf32>
    tpu.vector_store %arg5[%c0_10, %c0_11], %13 {strides = array<i32>} : memref<8x128xf32, #tpu.memory_space<vmem>>, vector<8x128xf32>,
    return
  }
}

</mosaic_0001>

<llo_original>
// kernel: tpu_custom_call.1
$region0: #{tpu_custom_call.1}
  #allocation0 [shape = 'u32[]', space=smem, size = 0x4, offset = 0x4, fixed_abs, tag = 'smem constant byte address 0x4 - core index']
  #allocation1 [shape = 'u32[144,128]{1,0:T(1,128)}', space=vmem, size = 0x12000, scoped, tag = 'internal scratch']
  %s0 = inlined_call_operand.hbm [shape: f32[8,128], index: 0, kind: input, shape index: {}]
  %s1 = inlined_call_operand.hbm [shape: bf16[128,128], index: 1, kind: input, shape index: {}]
  %s2 = inlined_call_operand.vmem [shape: f32[1,128], index: 2, kind: input, shape index: {}]
  %s3 = inlined_call_operand.hbm [shape: bf16[128,128], index: 3, kind: input, shape index: {}]
  %s4 = inlined_call_operand.vmem [shape: f32[1,128], index: 4, kind: input, shape index: {}]
  %s5 = inlined_call_operand.hbm [shape: f32[8,128], index: 5, kind: output, shape index: {}]
  %s6 = sld [smem:[#allocation0]]
  $region42: #{tpu_custom_call.1} parent=0
    _
  %s8 = ssub.s32 1, %s6
  %s9 = scalar_select 0, %s8, %s6
  $region1: #{tpu_custom_call.1} parent=0
    #allocation2 [shape = 'u8[4096]{0}', space=vmem, size = 0x1000, scoped, tag = 'input window, operand 0, single buffered']
    #allocation3 [shape = 's32[1]{0}', space=sflag, size = 0x4, scoped, tag = 'scoped memory for tpu_custom_call.1']
    #allocation4 [shape = 's32[1]{0}', space=sflag, size = 0x4, scoped, tag = 'scoped memory for tpu_custom_call.1']
    #allocation5 [shape = 'u8[32768]{0}', space=vmem, size = 0x8000, scoped, tag = 'input window, operand 1, single buffered']
    #allocation6 [shape = 's32[1]{0}', space=sflag, size = 0x4, scoped, tag = 'scoped memory for tpu_custom_call.1']
    #allocation7 [shape = 'u8[32768]{0}', space=vmem, size = 0x8000, scoped, tag = 'input window, operand 3, single buffered']
    #allocation8 [shape = 'u8[4096]{0}', space=vmem, size = 0x1000, scoped, tag = 'output window, operand 0, single buffered']
    %10 = vsyncpa [#allocation3], 0
    %11 = vsyncpa [#allocation6], 0
    %12 = vsyncpa [#allocation4], 0
    // Predicated region
    $region2: #{tpu_custom_call.1} parent=1 // pred_check
      _
    $region3: #{tpu_custom_call.1} parent=1 // pred_check_branch
      %14 = sbr.rel (0) target = $region5
    $region4: #{tpu_custom_call.1} parent=1 // pred_region
      %s16 = ssub.s32 128, 128
      %17 = vsyncadd [#allocation3], %s16
      %s19 = sshll.u32 [#allocation2], 4
      %s20 = int_to_ptr.vmem [resolvable:$true] %s19
      %22 = dma.hbm_to_vmem [thread:$0]  %s0, 128, %s20, [#allocation3]
    $region5: #{tpu_custom_call.1} parent=1 // pred_fallthru
      _
    // Predicated region
    $region6: #{tpu_custom_call.1} parent=1 // pred_check
      _
    $region7: #{tpu_custom_call.1} parent=1 // pred_check_branch
      %24 = sbr.rel (0) target = $region9
    $region8: #{tpu_custom_call.1} parent=1 // pred_region
      %s26 = ssub.s32 1024, 1024
      %27 = vsyncadd [#allocation6], %s26
      %s28 = sshll.u32 [#allocation5], 4
      %s29 = int_to_ptr.vmem [resolvable:$true] %s28
      %34 = dma.hbm_to_vmem [thread:$0]  %s1, 1024, %s29, [#allocation6], 64, 64, 4
    $region9: #{tpu_custom_call.1} parent=1 // pred_fallthru
      _
    // Predicated region
    $region10: #{tpu_custom_call.1} parent=1 // pred_check
      _
    $region11: #{tpu_custom_call.1} parent=1 // pred_check_branch
      %36 = sbr.rel (0) target = $region13
    $region12: #{tpu_custom_call.1} parent=1 // pred_region
      _
    $region13: #{tpu_custom_call.1} parent=1 // pred_fallthru
      _
    // Predicated region
    $region14: #{tpu_custom_call.1} parent=1 // pred_check
      _
    $region15: #{tpu_custom_call.1} parent=1 // pred_check_branch
      %38 = sbr.rel (0) target = $region17
    $region16: #{tpu_custom_call.1} parent=1 // pred_region
      %s40 = ssub.s32 1024, 1024
      %41 = vsyncadd [#allocation6], %s40
      %s42 = sshll.u32 [#allocation7], 4
      %s43 = int_to_ptr.vmem [resolvable:$true] %s42
      %48 = dma.hbm_to_vmem [thread:$0]  %s3, 1024, %s43, [#allocation6], 64, 64, 4
    $region17: #{tpu_custom_call.1} parent=1 // pred_fallthru
      _
    // Predicated region
    $region18: #{tpu_custom_call.1} parent=1 // pred_check
      _
    $region19: #{tpu_custom_call.1} parent=1 // pred_check_branch
      %50 = sbr.rel (0) target = $region21
    $region20: #{tpu_custom_call.1} parent=1 // pred_region
      _
    $region21: #{tpu_custom_call.1} parent=1 // pred_fallthru
      _
    // Predicated region
    $region22: #{tpu_custom_call.1} parent=1 // pred_check
      _
    $region23: #{tpu_custom_call.1} parent=1 // pred_check_branch
      %52 = sbr.rel (0) target = $region25
    $region24: #{tpu_custom_call.1} parent=1 // pred_region
      %53 = dma.done [#allocation3], 128
    $region25: #{tpu_custom_call.1} parent=1 // pred_fallthru
      _
    // Predicated region
    $region26: #{tpu_custom_call.1} parent=1 // pred_check
      _
    $region27: #{tpu_custom_call.1} parent=1 // pred_check_branch
      %55 = sbr.rel (0) target = $region29
    $region28: #{tpu_custom_call.1} parent=1 // pred_region
      %56 = dma.done [#allocation6], 1024
    $region29: #{tpu_custom_call.1} parent=1 // pred_fallthru
      _
    // Predicated region
    $region30: #{tpu_custom_call.1} parent=1 // pred_check
      _
    $region31: #{tpu_custom_call.1} parent=1 // pred_check_branch
      %58 = sbr.rel (0) target = $region33
    $region32: #{tpu_custom_call.1} parent=1 // pred_region
      %59 = dma.done [#allocation6], 1024
    $region33: #{tpu_custom_call.1} parent=1 // pred_fallthru
      _
    %v61 = vld [vmem:[#allocation2] sm:$0xff]
    %v62 = vpack.c.bf16 %v61, %v61
    %v63 = vld [vmem:[#allocation5] sm:$0xf]
    %v64 = vld [vmem:[#allocation5 + $0x4] sm:$0xf]
    %v65 = vld [vmem:[#allocation5 + $0x8] sm:$0xf]
    %v66 = vld [vmem:[#allocation5 + $0xc] sm:$0xf]
    %v67 = vld [vmem:[#allocation5 + $0x10] sm:$0xf]
    %v68 = vld [vmem:[#allocation5 + $0x14] sm:$0xf]
    %v69 = vld [vmem:[#allocation5 + $0x18] sm:$0xf]
    %v70 = vld [vmem:[#allocation5 + $0x1c] sm:$0xf]
    %v71 = vld [vmem:[#allocation5 + $0x20] sm:$0xf]
    %v72 = vld [vmem:[#allocation5 + $0x24] sm:$0xf]
    %v73 = vld [vmem:[#allocation5 + $0x28] sm:$0xf]
    %v74 = vld [vmem:[#allocation5 + $0x2c] sm:$0xf]
    %v75 = vld [vmem:[#allocation5 + $0x30] sm:$0xf]
    %v76 = vld [vmem:[#allocation5 + $0x34] sm:$0xf]
    %v77 = vld [vmem:[#allocation5 + $0x38] sm:$0xf]
    %v78 = vld [vmem:[#allocation5 + $0x3c] sm:$0xf]
    %v79 = vld [vmem:[%s2] sm:$0x1]
    %v81 = vlaneseq
    %v82 = vshrl.u32 %v81, 7
    %v83 = vsub.s32 0, %v82
    %v84 = vrot.slane %v79, %v83
    %v102 = vunpack.c.l.b16 %v63
    %v103 = vunpack.c.l.b16 %v64
    %v104 = vunpack.c.l.b16 %v65
    %v105 = vunpack.c.l.b16 %v66
    %v106 = vunpack.c.l.b16 %v67
    %v107 = vunpack.c.l.b16 %v68
    %v108 = vunpack.c.l.b16 %v69
    %v109 = vunpack.c.l.b16 %v70
    %v110 = vunpack.c.l.b16 %v71
    %v111 = vunpack.c.l.b16 %v72
    %v112 = vunpack.c.l.b16 %v73
    %v113 = vunpack.c.l.b16 %v74
    %v114 = vunpack.c.l.b16 %v75
    %v115 = vunpack.c.l.b16 %v76
    %v116 = vunpack.c.l.b16 %v77
    %v117 = vunpack.c.l.b16 %v78
    %v118 = vpack.c.b16 %v103, %v102
    %v119 = vpack.c.b16 %v105, %v104
    %v120 = vpack.c.b16 %v107, %v106
    %v121 = vpack.c.b16 %v109, %v108
    %v122 = vpack.c.b16 %v111, %v110
    %v123 = vpack.c.b16 %v113, %v112
    %v124 = vpack.c.b16 %v115, %v114
    %v125 = vpack.c.b16 %v117, %v116
    %134 = vmatprep.subr.bf16.mxu0 0
    %135 = vmatpush1.bf16.msra.mxu0 %v118
    %136 = vmatprep.subr.bf16.mxu0 0
    %137 = vmatpush1.bf16.msra.mxu0 %v119
    %138 = vmatprep.subr.bf16.mxu0 0
    %139 = vmatpush1.bf16.msra.mxu0 %v120
    %140 = vmatprep.subr.bf16.mxu0 0
    %141 = vmatpush1.bf16.msra.mxu0 %v121
    %142 = vmatprep.subr.bf16.mxu0 0
    %143 = vmatpush1.bf16.msra.mxu0 %v122
    %144 = vmatprep.subr.bf16.mxu0 0
    %145 = vmatpush1.bf16.msra.mxu0 %v123
    %146 = vmatprep.subr.bf16.mxu0 0
    %147 = vmatpush1.bf16.msra.mxu0 %v124
    %148 = vmatprep.subr.bf16.mxu0 0
    %149 = vmatpush1.bf16.msra.mxu0 %v125
    %150 = vmatprep.subr.bf16.mxu0 0
    %151 = vmatpush1.bf16.msra.mxu0 0
    %152 = vmatprep.subr.bf16.mxu0 0
    %153 = vmatpush1.bf16.msra.mxu0 0
    %154 = vmatprep.subr.bf16.mxu0 0
    %155 = vmatpush1.bf16.msra.mxu0 0
    %156 = vmatprep.subr.bf16.mxu0 0
    %157 = vmatpush1.bf16.msra.mxu0 0
    %158 = vmatprep.subr.bf16.mxu0 0
    %159 = vmatpush1.bf16.msra.mxu0 0
    %160 = vmatprep.subr.bf16.mxu0 0
    %161 = vmatpush1.bf16.msra.mxu0 0
    %162 = vmatprep.subr.bf16.mxu0 0
    %163 = vmatpush1.bf16.msra.mxu0 0
    %164 = vmatprep.subr.bf16.mxu0 0
    %165 = vmatpush1.bf16.msra.mxu0 0
    %166 = vmatprep.mubr.bf16.mxu0 0
    %167 = vmatmul.mubr.bf16.gmra.mrb[0].mxu0 %v62
    %v168 = vpop.f32.mrb[0].mxu0
    %v169 = vadd.f32 %v84, %v168
    %v170 = vpop.f32.mrb[0].mxu0
    %v171 = vpop.f32.mrb[0].mxu0
    %v172 = vpop.f32.mrb[0].mxu0
    %173 = vdwg.mxu0
    %v174 = vtanh.pop %v169
    %v175 = vpack.c.bf16 %v174, %v174
    %v176 = vld [vmem:[#allocation7] sm:$0xf]
    %v177 = vld [vmem:[#allocation7 + $0x4] sm:$0xf]
    %v178 = vld [vmem:[#allocation7 + $0x8] sm:$0xf]
    %v179 = vld [vmem:[#allocation7 + $0xc] sm:$0xf]
    %v180 = vld [vmem:[#allocation7 + $0x10] sm:$0xf]
    %v181 = vld [vmem:[#allocation7 + $0x14] sm:$0xf]
    %v182 = vld [vmem:[#allocation7 + $0x18] sm:$0xf]
    %v183 = vld [vmem:[#allocation7 + $0x1c] sm:$0xf]
    %v184 = vld [vmem:[#allocation7 + $0x20] sm:$0xf]
    %v185 = vld [vmem:[#allocation7 + $0x24] sm:$0xf]
    %v186 = vld [vmem:[#allocation7 + $0x28] sm:$0xf]
    %v187 = vld [vmem:[#allocation7 + $0x2c] sm:$0xf]
    %v188 = vld [vmem:[#allocation7 + $0x30] sm:$0xf]
    %v189 = vld [vmem:[#allocation7 + $0x34] sm:$0xf]
    %v190 = vld [vmem:[#allocation7 + $0x38] sm:$0xf]
    %v191 = vld [vmem:[#allocation7 + $0x3c] sm:$0xf]
    %v192 = vld [vmem:[%s4] sm:$0x1]
    %v194 = vlaneseq
    %v195 = vshrl.u32 %v194, 7
    %v196 = vsub.s32 0, %v195
    %v197 = vrot.slane %v192, %v196
    %v215 = vunpack.c.l.b16 %v176
    %v216 = vunpack.c.l.b16 %v177
    %v217 = vunpack.c.l.b16 %v178
    %v218 = vunpack.c.l.b16 %v179
    %v219 = vunpack.c.l.b16 %v180
    %v220 = vunpack.c.l.b16 %v181
    %v221 = vunpack.c.l.b16 %v182
    %v222 = vunpack.c.l.b16 %v183
    %v223 = vunpack.c.l.b16 %v184
    %v224 = vunpack.c.l.b16 %v185
    %v225 = vunpack.c.l.b16 %v186
    %v226 = vunpack.c.l.b16 %v187
    %v227 = vunpack.c.l.b16 %v188
    %v228 = vunpack.c.l.b16 %v189
    %v229 = vunpack.c.l.b16 %v190
    %v230 = vunpack.c.l.b16 %v191
    %v231 = vpack.c.b16 %v216, %v215
    %v232 = vpack.c.b16 %v218, %v217
    %v233 = vpack.c.b16 %v220, %v219
    %v234 = vpack.c.b16 %v222, %v221
    %v235 = vpack.c.b16 %v224, %v223
    %v236 = vpack.c.b16 %v226, %v225
    %v237 = vpack.c.b16 %v228, %v227
    %v238 = vpack.c.b16 %v230, %v229
    %247 = vmatprep.subr.bf16.mxu0 0
    %248 = vmatpush1.bf16.msra.mxu0 %v231
    %249 = vmatprep.subr.bf16.mxu0 0
    %250 = vmatpush1.bf16.msra.mxu0 %v232
    %251 = vmatprep.subr.bf16.mxu0 0
    %252 = vmatpush1.bf16.msra.mxu0 %v233
    %253 = vmatprep.subr.bf16.mxu0 0
    %254 = vmatpush1.bf16.msra.mxu0 %v234
    %255 = vmatprep.subr.bf16.mxu0 0
    %256 = vmatpush1.bf16.msra.mxu0 %v235
    %257 = vmatprep.subr.bf16.mxu0 0
    %258 = vmatpush1.bf16.msra.mxu0 %v236
    %259 = vmatprep.subr.bf16.mxu0 0
    %260 = vmatpush1.bf16.msra.mxu0 %v237
    %261 = vmatprep.subr.bf16.mxu0 0
    %262 = vmatpush1.bf16.msra.mxu0 %v238
    %263 = vmatprep.subr.bf16.mxu0 0
    %264 = vmatpush1.bf16.msra.mxu0 0
    %265 = vmatprep.subr.bf16.mxu0 0
    %266 = vmatpush1.bf16.msra.mxu0 0
    %267 = vmatprep.subr.bf16.mxu0 0
    %268 = vmatpush1.bf16.msra.mxu0 0
    %269 = vmatprep.subr.bf16.mxu0 0
    %270 = vmatpush1.bf16.msra.mxu0 0
    %271 = vmatprep.subr.bf16.mxu0 0
    %272 = vmatpush1.bf16.msra.mxu0 0
    %273 = vmatprep.subr.bf16.mxu0 0
    %274 = vmatpush1.bf16.msra.mxu0 0
    %275 = vmatprep.subr.bf16.mxu0 0
    %276 = vmatpush1.bf16.msra.mxu0 0
    %277 = vmatprep.subr.bf16.mxu0 0
    %278 = vmatpush1.bf16.msra.mxu0 0
    %279 = vmatprep.mubr.bf16.mxu0 0
    %280 = vmatmul.mubr.bf16.gmra.mrb[0].mxu0 %v175
    %v281 = vpop.f32.mrb[0].mxu0
    %v282 = vadd.f32 %v197, %v281
    %v283 = vpop.f32.mrb[0].mxu0
    %v284 = vpop.f32.mrb[0].mxu0
    %v285 = vpop.f32.mrb[0].mxu0
    %286 = vdwg.mxu0
    %287 = vst [vmem:[#allocation8] sm:$0xff] %v282
    // Predicated region
    $region34: #{tpu_custom_call.1} parent=1 // pred_check
      _
    $region35: #{tpu_custom_call.1} parent=1 // pred_check_branch
      %289 = sbr.rel (0) target = $region37
    $region36: #{tpu_custom_call.1} parent=1 // pred_region
      %s291 = ssub.s32 128, 128
      %292 = vsyncadd [#allocation4], %s291
      %s294 = sshll.u32 [#allocation8], 4
      %s295 = int_to_ptr.vmem [resolvable:$true] %s294
      %297 = dma.vmem_to_hbm [thread:$0]  %s295, 128, %s5, [#allocation4]
    $region37: #{tpu_custom_call.1} parent=1 // pred_fallthru
      _
    // Predicated region
    $region38: #{tpu_custom_call.1} parent=1 // pred_check
      _
    $region39: #{tpu_custom_call.1} parent=1 // pred_check_branch
      %299 = sbr.rel (0) target = $region41
    $region40: #{tpu_custom_call.1} parent=1 // pred_region
      %300 = dma.done [#allocation4], 128
    $region41: #{tpu_custom_call.1} parent=1 // pred_fallthru
      _
    %301 = vsyncpa [#allocation3], 1
    %302 = vsyncpa [#allocation6], 1
    %303 = vsyncpa [#allocation4], 1

</llo_original>
